<compile_context>
chip_gen: v7x
topology: tpu7x:2x2x1
jax: 0.10.0
libtpu: 0.0.40
codegen_flags: <defaults>
</compile_context>

<pallas_src>
import jax
import jax.numpy as jnp
from jax.experimental import pallas as pl
from jax.experimental.pallas import tpu as pltpu


def _round_up(a: int, b: int) -> int:
    return (a + b - 1) // b * b


def linear_kernel(w_ref, b_ref, x_ref, o_ref):
    # w_ref: (4,) f32 in SMEM, row-major [w00, w01, w10, w11] of nn.Linear.weight (out, in).
    # b_ref: (2,) f32 in SMEM.
    # x_ref: (2, TN) lane-dense input block (feature-major, batch on lanes).
    # o_ref: (2, TN) lane-dense output block.
    x0 = x_ref[0:1, :].astype(jnp.float32)   # (1, TN)
    x1 = x_ref[1:2, :].astype(jnp.float32)   # (1, TN)
    # y[o, :] = w[o,0]*x[0,:] + w[o,1]*x[1,:] + b[o]   -- pure VPU FMAs, no MXU.
    y0 = w_ref[0] * x0 + w_ref[1] * x1 + b_ref[0]
    y1 = w_ref[2] * x0 + w_ref[3] * x1 + b_ref[1]
    o_ref[0:1, :] = y0.astype(o_ref.dtype)
    o_ref[1:2, :] = y1.astype(o_ref.dtype)


def random_forest_forward(x, weight, bias, *, tn=512):
    """Pallas equivalent of RandomForest.forward (a single nn.Linear(2, 2)).

    x: (N, 2), weight: (2, 2) in nn.Linear (out, in) convention, bias: (2,).
    Returns (N, 2).
    """
    n, f_in = x.shape
    f_out, f_in_w = weight.shape
    assert f_in == 2 and f_in_w == 2 and f_out == 2

    # Lane-dense layout: put the batch on the lane (last) dimension.
    xt = x.T                                    # (2, N)
    n_pad = _round_up(max(n, 1), 128)           # lane multiple
    tn = min(tn, n_pad)
    n_pad = _round_up(n_pad, tn)                # divisible by the tile size
    if n_pad != n:
        xt = jnp.pad(xt, ((0, 0), (0, n_pad - n)))

    w_flat = weight.reshape(-1).astype(jnp.float32)   # (4,)  -> SMEM scalars
    b_flat = bias.reshape(-1).astype(jnp.float32)     # (2,)  -> SMEM scalars

    grid = (n_pad // tn,)
    out_t = pl.pallas_call(
        linear_kernel,
        out_shape=jax.ShapeDtypeStruct((f_out, n_pad), x.dtype),
        grid=grid,
        in_specs=[
            pl.BlockSpec(memory_space=pltpu.MemorySpace.SMEM),   # weight scalars
            pl.BlockSpec(memory_space=pltpu.MemorySpace.SMEM),   # bias scalars
            pl.BlockSpec((f_in, tn), lambda i: (0, i)),          # x block  (2, TN)
        ],
        out_specs=pl.BlockSpec((f_out, tn), lambda i: (0, i)),   # y block  (2, TN)
        compiler_params=pltpu.CompilerParams(
            dimension_semantics=("parallel",)),  # batch axis can shard across TCs (v7x)
    )(w_flat, b_flat, xt)

    return out_t[:, :n].T                        # back to (N, 2)


if __name__ == "__main__":
    key = jax.random.PRNGKey(0)
    kx, kw, kb = jax.random.split(key, 3)

    # Small shapes consistent with nn.Linear(2, 2): batch=8, features=2.
    batch = 8
    x = jax.random.normal(kx, (batch, 2), dtype=jnp.float32)

    # Deterministic parameter init (mimics nn.Linear's uniform(-1/sqrt(fan_in), ...) range).
    bound = 1.0 / jnp.sqrt(2.0)
    weight = jax.random.uniform(kw, (2, 2), minval=-bound, maxval=bound, dtype=jnp.float32)
    bias = jax.random.uniform(kb, (2,), minval=-bound, maxval=bound, dtype=jnp.float32)

    out = jax.block_until_ready(random_forest_forward(x, weight, bias))
    ref = x @ weight.T + bias
    assert out.shape == (batch, 2)
    assert jnp.allclose(out, ref, atol=1e-5, rtol=1e-5)

    # Secondary check: a batch that exercises lane padding and a multi-step grid.
    x2 = jax.random.normal(kx, (300, 2), dtype=jnp.float32)
    out2 = jax.block_until_ready(random_forest_forward(x2, weight, bias, tn=128))
    ref2 = x2 @ weight.T + bias
    assert out2.shape == (300, 2)
    assert jnp.allclose(out2, ref2, atol=1e-5, rtol=1e-5)

    print("KERNEL_OK")
</pallas_src>

<mosaic_0001>
module attributes {stable_mosaic.version = 11 : i64} {
  func.func @linear_kernel(%arg0: i32, %arg1: memref<4xf32, #tpu.memory_space<smem>>, %arg2: memref<2xf32, #tpu.memory_space<smem>>, %arg3: memref<2x128xf32, #tpu.memory_space<vmem>>, %arg4: memref<2x128xf32, #tpu.memory_space<vmem>>) attributes {dimension_semantics = [#tpu.dimension_semantics<parallel>], iteration_bounds = array<i64: 1>, scalar_prefetch = 0 : i64, scratch_operands = 0 : i64, tpu.core_type = #tpu.core_type<tc>, window_params = [{transform_indices = @transform_0, window_bounds = array<i64: 4>}, {transform_indices = @transform_1, window_bounds = array<i64: 2>}, {transform_indices = @transform_2, window_bounds = array<i64: 2, 128>}, {transform_indices = @transform_3, window_bounds = array<i64: 2, 128>}]} {
    %c0 = arith.constant 0 : index
    %c0_0 = arith.constant 0 : index
    %0 = vector.load %arg3[%c0, %c0_0] : memref<2x128xf32, #tpu.memory_space<vmem>>, vector<1x128xf32>
    %c1 = arith.constant 1 : index
    %c0_1 = arith.constant 0 : index
    %1 = vector.load %arg3[%c1, %c0_1] : memref<2x128xf32, #tpu.memory_space<vmem>>, vector<1x128xf32>
    %c0_2 = arith.constant 0 : index
    %2 = memref.load %arg1[%c0_2] : memref<4xf32, #tpu.memory_space<smem>>
    %3 = vector.broadcast %2 : f32 to vector<1x128xf32>
    %4 = arith.mulf %3, %0 : vector<1x128xf32>
    %c1_3 = arith.constant 1 : index
    %5 = memref.load %arg1[%c1_3] : memref<4xf32, #tpu.memory_space<smem>>
    %6 = vector.broadcast %5 : f32 to vector<1x128xf32>
    %7 = arith.mulf %6, %1 : vector<1x128xf32>
    %8 = arith.addf %4, %7 : vector<1x128xf32>
    %c0_4 = arith.constant 0 : index
    %9 = memref.load %arg2[%c0_4] : memref<2xf32, #tpu.memory_space<smem>>
    %10 = vector.broadcast %9 : f32 to vector<1x128xf32>
    %11 = arith.addf %8, %10 : vector<1x128xf32>
    %c2 = arith.constant 2 : index
    %12 = memref.load %arg1[%c2] : memref<4xf32, #tpu.memory_space<smem>>
    %13 = vector.broadcast %12 : f32 to vector<1x128xf32>
    %14 = arith.mulf %13, %0 : vector<1x128xf32>
    %c3 = arith.constant 3 : index
    %15 = memref.load %arg1[%c3] : memref<4xf32, #tpu.memory_space<smem>>
    %16 = vector.broadcast %15 : f32 to vector<1x128xf32>
    %17 = arith.mulf %16, %1 : vector<1x128xf32>
    %18 = arith.addf %14, %17 : vector<1x128xf32>
    %c1_5 = arith.constant 1 : index
    %19 = memref.load %arg2[%c1_5] : memref<2xf32, #tpu.memory_space<smem>>
    %20 = vector.broadcast %19 : f32 to vector<1x128xf32>
    %21 = arith.addf %18, %20 : vector<1x128xf32>
    %c0_6 = arith.constant 0 : index
    %c0_7 = arith.constant 0 : index
    %22 = vector.load %arg4[%c0_6, %c0_7] : memref<2x128xf32, #tpu.memory_space<vmem>>, vector<1x128xf32>
    tpu.vector_store %arg4[%c0_6, %c0_7], %11 {strides = array<i32>} : memref<2x128xf32, #tpu.memory_space<vmem>>, vector<1x128xf32>,
    %c1_8 = arith.constant 1 : index
    %c0_9 = arith.constant 0 : index
    %23 = vector.load %arg4[%c1_8, %c0_9] : memref<2x128xf32, #tpu.memory_space<vmem>>, vector<1x128xf32>
    tpu.vector_store %arg4[%c1_8, %c0_9], %21 {strides = array<i32>} : memref<2x128xf32, #tpu.memory_space<vmem>>, vector<1x128xf32>,
    return
  }
  func.func @transform_0(%arg0: i32) -> i32 {
    %c0_i32 = arith.constant 0 : i32
    %c0_i32_0 = arith.constant 0 : i32
    return %c0_i32 : i32
  }
  func.func @transform_1(%arg0: i32) -> i32 {
    %c0_i32 = arith.constant 0 : i32
    %c0_i32_0 = arith.constant 0 : i32
    return %c0_i32 : i32
  }
  func.func @transform_2(%arg0: i32) -> (i32, i32) {
    %c0_i32 = arith.constant 0 : i32
    %c0_i32_0 = arith.constant 0 : i32
    return %c0_i32, %arg0 : i32, i32
  }
  func.func @transform_3(%arg0: i32) -> (i32, i32) {
    %c0_i32 = arith.constant 0 : i32
    %c0_i32_0 = arith.constant 0 : i32
    return %c0_i32, %arg0 : i32, i32
  }
}

</mosaic_0001>

<llo_original>
// kernel: tpu_custom_call.1
$region0: #{tpu_custom_call.1}
  #allocation0 [shape = 'u32[]', space=smem, size = 0x4, offset = 0x4, fixed_abs, tag = 'smem constant byte address 0x4 - core index']
  #allocation1 [shape = 'u32[144,128]{1,0:T(1,128)}', space=vmem, size = 0x12000, scoped, tag = 'internal scratch']
  %s0 = inlined_call_operand.hbm [shape: f32[4], index: 0, kind: input, shape index: {}]
  %s1 = inlined_call_operand.vmem [shape: f32[2], index: 1, kind: input, shape index: {}]
  %s2 = inlined_call_operand.vmem [shape: f32[2,128], index: 2, kind: input, shape index: {}]
  %s3 = inlined_call_operand.hbm [shape: f32[2,128], index: 3, kind: output, shape index: {}]
  %s4 = sld [smem:[#allocation0]]
  $region30: #{tpu_custom_call.1} parent=0
    _
  %s6 = ssub.s32 1, %s4
  %s7 = scalar_select 0, %s6, %s4
  $region1: #{tpu_custom_call.1} parent=0
    #allocation2 [shape = 'u8[512]{0}', space=smem, size = 0x200, scoped, tag = 'input window, operand 0, single buffered']
    #allocation3 [shape = 's32[1]{0}', space=sflag, size = 0x4, scoped, tag = 'scoped memory for tpu_custom_call.1']
    #allocation4 [shape = 's32[1]{0}', space=sflag, size = 0x4, scoped, tag = 'scoped memory for tpu_custom_call.1']
    #allocation5 [shape = 's32[1]{0}', space=sflag, size = 0x4, scoped, tag = 'scoped memory for tpu_custom_call.1']
    #allocation6 [shape = 'u8[512]{0}', space=smem, size = 0x200, scoped, tag = 'input window, operand 1, single buffered']
    #allocation7 [shape = 'u8[1024]{0}', space=vmem, size = 0x400, scoped, tag = 'output window, operand 0, single buffered']
    %8 = vsyncpa [#allocation4], 0
    %9 = vsyncpa [#allocation5], 0
    %10 = vsyncpa [#allocation3], 0
    // Predicated region
    $region2: #{tpu_custom_call.1} parent=1 // pred_check
      _
    $region3: #{tpu_custom_call.1} parent=1 // pred_check_branch
      %12 = sbr.rel (0) target = $region5
    $region4: #{tpu_custom_call.1} parent=1 // pred_region
      %s14 = ssub.s32 16, 16
      %15 = vsyncadd [#allocation4], %s14
      %18 = dma.hbm_to_smem %s0, 16, [#allocation2], [#allocation4]
    $region5: #{tpu_custom_call.1} parent=1 // pred_fallthru
      _
    // Predicated region
    $region6: #{tpu_custom_call.1} parent=1 // pred_check
      _
    $region7: #{tpu_custom_call.1} parent=1 // pred_check_branch
      %20 = sbr.rel (0) target = $region9
    $region8: #{tpu_custom_call.1} parent=1 // pred_region
      %s22 = ssub.s32 16, 16
      %23 = vsyncadd [#allocation5], %s22
      %s25 = sshll.u32 %s1, 4
      %s26 = int_to_ptr.vmem [resolvable:$true] %s25
      %28 = dma.vmem_to_smem %s26, 16, [#allocation6], [#allocation5]
    $region9: #{tpu_custom_call.1} parent=1 // pred_fallthru
      _
    // Predicated region
    $region10: #{tpu_custom_call.1} parent=1 // pred_check
      _
    $region11: #{tpu_custom_call.1} parent=1 // pred_check_branch
      %30 = sbr.rel (0) target = $region13
    $region12: #{tpu_custom_call.1} parent=1 // pred_region
      _
    $region13: #{tpu_custom_call.1} parent=1 // pred_fallthru
      _
    // Predicated region
    $region14: #{tpu_custom_call.1} parent=1 // pred_check
      _
    $region15: #{tpu_custom_call.1} parent=1 // pred_check_branch
      %32 = sbr.rel (0) target = $region17
    $region16: #{tpu_custom_call.1} parent=1 // pred_region
      %33 = dma.done [#allocation4], 16
    $region17: #{tpu_custom_call.1} parent=1 // pred_fallthru
      _
    // Predicated region
    $region18: #{tpu_custom_call.1} parent=1 // pred_check
      _
    $region19: #{tpu_custom_call.1} parent=1 // pred_check_branch
      %35 = sbr.rel (0) target = $region21
    $region20: #{tpu_custom_call.1} parent=1 // pred_region
      %36 = dma.done [#allocation5], 16
    $region21: #{tpu_custom_call.1} parent=1 // pred_fallthru
      _
    %37 = sfence
    %v38 = vld [vmem:[%s2] sm:$0x1]
    %v39 = vld [vmem:[%s2 + $0x1] sm:$0x1]
    %s40 = sld [smem:[#allocation2]]
    %v41 = vstv %s40
    %v42 = vmul.f32 %v41, %v38
    %s43 = sld [smem:[#allocation2 + $0x1]]
    %v44 = vstv %s43
    %v45 = vmul.f32 %v44, %v39
    %v46 = vadd.f32 %v42, %v45
    %s47 = sld [smem:[#allocation6]]
    %v48 = vstv %s47
    %v49 = vadd.f32 %v46, %v48
    %s50 = sld [smem:[#allocation2 + $0x2]]
    %v51 = vstv %s50
    %v52 = vmul.f32 %v51, %v38
    %s53 = sld [smem:[#allocation2 + $0x3]]
    %v54 = vstv %s53
    %v55 = vmul.f32 %v54, %v39
    %v56 = vadd.f32 %v52, %v55
    %s57 = sld [smem:[#allocation6 + $0x1]]
    %v58 = vstv %s57
    %v59 = vadd.f32 %v56, %v58
    %60 = vst [vmem:[#allocation7] sm:$0x1] %v49
    %61 = vst [vmem:[#allocation7 + $0x1] sm:$0x1] %v59
    // Predicated region
    $region22: #{tpu_custom_call.1} parent=1 // pred_check
      _
    $region23: #{tpu_custom_call.1} parent=1 // pred_check_branch
      %63 = sbr.rel (0) target = $region25
    $region24: #{tpu_custom_call.1} parent=1 // pred_region
      %s65 = ssub.s32 32, 32
      %66 = vsyncadd [#allocation3], %s65
      %s68 = sshll.u32 [#allocation7], 4
      %s69 = int_to_ptr.vmem [resolvable:$true] %s68
      %71 = dma.vmem_to_hbm [thread:$0]  %s69, 32, %s3, [#allocation3]
    $region25: #{tpu_custom_call.1} parent=1 // pred_fallthru
      _
    // Predicated region
    $region26: #{tpu_custom_call.1} parent=1 // pred_check
      _
    $region27: #{tpu_custom_call.1} parent=1 // pred_check_branch
      %73 = sbr.rel (0) target = $region29
    $region28: #{tpu_custom_call.1} parent=1 // pred_region
      %74 = dma.done [#allocation3], 32
    $region29: #{tpu_custom_call.1} parent=1 // pred_fallthru
      _
    %75 = vsyncpa [#allocation3], 1
    %76 = vsyncpa [#allocation4], 1
    %77 = vsyncpa [#allocation5], 1

</llo_original>
